<compile_context>
chip_gen: v5e
topology: v5e:2x2
jax: 0.10.0
libtpu: 0.0.40
codegen_flags: <defaults>
</compile_context>

<pallas_src>
import math
from functools import partial

import jax
import jax.numpy as jnp
from jax import lax
from jax.experimental import pallas as pl
from jax.experimental.pallas import tpu as pltpu


def _diversity_kernel(x_ref, out_ref, acc_ref, *, n_total, block_n, num_poses, inv_cnt):
    step = pl.program_id(0)

    @pl.when(step == 0)
    def _():
        acc_ref[...] = jnp.zeros_like(acc_ref)

    # Global row index of every (b,t) slot in this block, for tail masking.
    row_idx = lax.broadcasted_iota(jnp.int32, (block_n, 1), 0) + step * block_n
    in_bounds = row_idx < n_total

    total = jnp.zeros((block_n, 1), jnp.float32)
    # K (number of pose samples) is small: fully unrolled i < j pair loop.
    for i in range(num_poses):
        xi = x_ref[i].astype(jnp.float32)                            # (block_n, E)
        for j in range(i + 1, num_poses):
            xj = x_ref[j].astype(jnp.float32)
            d = jnp.sum(jnp.abs(xi - xj), axis=-1, keepdims=True)    # L1, (block_n, 1)
            total = total + jnp.exp(-d)

    total = jnp.where(in_bounds, total, 0.0)
    acc_ref[...] += jnp.sum(total, keepdims=True)                    # (1, 1)

    @pl.when(step == pl.num_programs(0) - 1)
    def _():
        out_ref[...] = acc_ref[...] * inv_cnt


def diversity_loss_nojoint(pose, alpha=0.1, *, block_rows=None):
    """Pallas TPU implementation of DiversityLoss_nojoint.forward.

    `alpha` is accepted for signature parity but unused (as in the reference).
    """
    K, B, T, E = pose.shape
    N = B * T

    # Free reshape — the pairwise distances only couple the K axis, so we keep
    # the (K, N, E) layout instead of transposing to (N, K, E).
    x = pose.reshape(K, N, E)

    if block_rows is None:
        # Target ~2 MiB per input tile (double-buffered ~4 MiB of VMEM).
        target_bytes = 2 * 1024 * 1024
        bytes_per_row = max(1, K * E * x.dtype.itemsize)
        block_rows = max(8, min(N, target_bytes // bytes_per_row))
    block_rows = min(int(block_rows), N)
    if block_rows < N:
        block_rows = max(8, (block_rows // 8) * 8)   # sublane-aligned partial tiles
    grid_n = pl.cdiv(N, block_rows)

    cnt = B * T * K * (K - 1) / 2 if K > 1 else 1
    kernel = partial(_diversity_kernel, n_total=N, block_n=block_rows,
                     num_poses=K, inv_cnt=float(1.0 / cnt))

    out = pl.pallas_call(
        kernel,
        out_shape=jax.ShapeDtypeStruct((1, 1), jnp.float32),
        grid_spec=pltpu.PrefetchScalarGridSpec(
            num_scalar_prefetch=0,
            grid=(grid_n,),
            in_specs=[pl.BlockSpec((K, block_rows, E), lambda i: (0, i, 0))],
            out_specs=pl.BlockSpec((1, 1), lambda i: (0, 0)),
            scratch_shapes=[pltpu.VMEM((1, 1), jnp.float32)],
        ),
        compiler_params=pltpu.CompilerParams(
            dimension_semantics=("arbitrary",)),   # reduction axis (accumulator)
    )(x)

    return out[0, 0].astype(pose.dtype)


def _reference(pose):
    K, B, T, E = pose.shape
    feat = jnp.transpose(pose, (1, 2, 0, 3)).reshape(B * T, K, E)
    dist = jnp.sum(jnp.abs(feat[:, :, None, :] - feat[:, None, :, :]), axis=-1)
    triu = jnp.triu(jnp.ones((K, K), dtype=dist.dtype), k=1)
    loss = jnp.sum(jnp.exp(-dist) * triu)
    cnt = B * T * K * (K - 1) / 2 if K > 1 else 1
    return loss / cnt


if __name__ == "__main__":
    key = jax.random.PRNGKey(0)
    k1, k2 = jax.random.split(key)

    # Module-consistent small shapes: K pose samples, batch B, time T, pose dim E.
    K, B, T, E = 4, 2, 8, 32
    pose = jax.random.normal(k1, (K, B, T, E), dtype=jnp.float32)

    loss = jax.block_until_ready(diversity_loss_nojoint(pose))
    ref = _reference(pose)
    assert loss.shape == ref.shape == ()
    assert jnp.allclose(loss, ref, atol=1e-5, rtol=1e-5), (loss, ref)

    # Exercise the tail-masking path: N = B*T not a multiple of the block size.
    K2, B2, T2, E2 = 3, 2, 9, 16
    pose2 = jax.random.normal(k2, (K2, B2, T2, E2), dtype=jnp.float32)
    loss2 = jax.block_until_ready(diversity_loss_nojoint(pose2, block_rows=8))
    ref2 = _reference(pose2)
    assert jnp.allclose(loss2, ref2, atol=1e-5, rtol=1e-5), (loss2, ref2)

    print("KERNEL_OK")
</pallas_src>

<mosaic_0001>
module attributes {stable_mosaic.version = 11 : i64} {
  func.func @_diversity_kernel(%arg0: i32, %arg1: memref<4x16x32xf32, #tpu.memory_space<vmem>>, %arg2: memref<1x1xf32, #tpu.memory_space<vmem>>, %arg3: memref<1x1xf32, #tpu.memory_space<vmem>>) attributes {dimension_semantics = [#tpu.dimension_semantics<arbitrary>], iteration_bounds = array<i64: 1>, scalar_prefetch = 0 : i64, scratch_operands = 1 : i64, tpu.core_type = #tpu.core_type<tc>, window_params = [{transform_indices = @transform_0, window_bounds = array<i64: 4, 16, 32>}, {pipeline_mode = #tpu.pipeline_mode<synchronous>, transform_indices = @transform_1, window_bounds = array<i64: 1, 1>}]} {
    %c0_i32 = arith.constant 0 : i32
    %0 = arith.cmpi eq, %arg0, %c0_i32 : i32
    %1 = arith.extui %0 : i1 to i32
    %c0_i32_0 = arith.constant 0 : i32
    %2 = arith.cmpi ne, %1, %c0_i32_0 : i32
    scf.if %2 {
      %cst_45 = arith.constant 0.000000e+00 : f32
      %89 = vector.broadcast %cst_45 : f32 to vector<1x1xf32>
      %c0_46 = arith.constant 0 : index
      %c0_47 = arith.constant 0 : index
      %90 = vector.load %arg3[%c0_46, %c0_47] : memref<1x1xf32, #tpu.memory_space<vmem>>, vector<1x1xf32>
      tpu.vector_store %arg3[%c0_46, %c0_47], %89 {strides = array<i32>} : memref<1x1xf32, #tpu.memory_space<vmem>>, vector<1x1xf32>,
    } else {
    }
    %3 = tpu.iota {dimensions = array<i32: 0>} : vector<16x1xi32>
    %c16_i32 = arith.constant 16 : i32
    %4 = arith.muli %arg0, %c16_i32 : i32
    %5 = vector.broadcast %4 : i32 to vector<16x1xi32>
    %6 = arith.addi %3, %5 : vector<16x1xi32>
    %c16_i32_1 = arith.constant 16 : i32
    %7 = vector.broadcast %c16_i32_1 : i32 to vector<16x1xi32>
    %8 = arith.cmpi slt, %6, %7 : vector<16x1xi32>
    %cst = arith.constant 0.000000e+00 : f32
    %9 = vector.broadcast %cst : f32 to vector<16x1xf32>
    %c0 = arith.constant 0 : index
    %c0_2 = arith.constant 0 : index
    %c0_3 = arith.constant 0 : index
    %10 = vector.load %arg1[%c0, %c0_2, %c0_3] : memref<4x16x32xf32, #tpu.memory_space<vmem>>, vector<1x16x32xf32>
    %11 = vector.shape_cast %10 : vector<1x16x32xf32> to vector<16x32xf32>
    %c1 = arith.constant 1 : index
    %c0_4 = arith.constant 0 : index
    %c0_5 = arith.constant 0 : index
    %12 = vector.load %arg1[%c1, %c0_4, %c0_5] : memref<4x16x32xf32, #tpu.memory_space<vmem>>, vector<1x16x32xf32>
    %13 = vector.shape_cast %12 : vector<1x16x32xf32> to vector<16x32xf32>
    %14 = arith.subf %11, %13 : vector<16x32xf32>
    %15 = math.absf %14 : vector<16x32xf32>
    %cst_6 = arith.constant dense<0.000000e+00> : vector<16xf32>
    %16 = vector.multi_reduction <add>, %15, %cst_6 [1] : vector<16x32xf32> to vector<16xf32>
    %17 = vector.shape_cast %16 : vector<16xf32> to vector<16x1xf32>
    %cst_7 = arith.constant 0.000000e+00 : f32
    %18 = vector.broadcast %cst_7 : f32 to vector<16x1xf32>
    %19 = arith.subf %18, %17 : vector<16x1xf32>
    %20 = math.exp %19 : vector<16x1xf32>
    %21 = arith.addf %9, %20 : vector<16x1xf32>
    %c2 = arith.constant 2 : index
    %c0_8 = arith.constant 0 : index
    %c0_9 = arith.constant 0 : index
    %22 = vector.load %arg1[%c2, %c0_8, %c0_9] : memref<4x16x32xf32, #tpu.memory_space<vmem>>, vector<1x16x32xf32>
    %23 = vector.shape_cast %22 : vector<1x16x32xf32> to vector<16x32xf32>
    %24 = arith.subf %11, %23 : vector<16x32xf32>
    %25 = math.absf %24 : vector<16x32xf32>
    %cst_10 = arith.constant dense<0.000000e+00> : vector<16xf32>
    %26 = vector.multi_reduction <add>, %25, %cst_10 [1] : vector<16x32xf32> to vector<16xf32>
    %27 = vector.shape_cast %26 : vector<16xf32> to vector<16x1xf32>
    %cst_11 = arith.constant 0.000000e+00 : f32
    %28 = vector.broadcast %cst_11 : f32 to vector<16x1xf32>
    %29 = arith.subf %28, %27 : vector<16x1xf32>
    %30 = math.exp %29 : vector<16x1xf32>
    %31 = arith.addf %21, %30 : vector<16x1xf32>
    %c3 = arith.constant 3 : index
    %c0_12 = arith.constant 0 : index
    %c0_13 = arith.constant 0 : index
    %32 = vector.load %arg1[%c3, %c0_12, %c0_13] : memref<4x16x32xf32, #tpu.memory_space<vmem>>, vector<1x16x32xf32>
    %33 = vector.shape_cast %32 : vector<1x16x32xf32> to vector<16x32xf32>
    %34 = arith.subf %11, %33 : vector<16x32xf32>
    %35 = math.absf %34 : vector<16x32xf32>
    %cst_14 = arith.constant dense<0.000000e+00> : vector<16xf32>
    %36 = vector.multi_reduction <add>, %35, %cst_14 [1] : vector<16x32xf32> to vector<16xf32>
    %37 = vector.shape_cast %36 : vector<16xf32> to vector<16x1xf32>
    %cst_15 = arith.constant 0.000000e+00 : f32
    %38 = vector.broadcast %cst_15 : f32 to vector<16x1xf32>
    %39 = arith.subf %38, %37 : vector<16x1xf32>
    %40 = math.exp %39 : vector<16x1xf32>
    %41 = arith.addf %31, %40 : vector<16x1xf32>
    %c1_16 = arith.constant 1 : index
    %c0_17 = arith.constant 0 : index
    %c0_18 = arith.constant 0 : index
    %42 = vector.load %arg1[%c1_16, %c0_17, %c0_18] : memref<4x16x32xf32, #tpu.memory_space<vmem>>, vector<1x16x32xf32>
    %43 = vector.shape_cast %42 : vector<1x16x32xf32> to vector<16x32xf32>
    %c2_19 = arith.constant 2 : index
    %c0_20 = arith.constant 0 : index
    %c0_21 = arith.constant 0 : index
    %44 = vector.load %arg1[%c2_19, %c0_20, %c0_21] : memref<4x16x32xf32, #tpu.memory_space<vmem>>, vector<1x16x32xf32>
    %45 = vector.shape_cast %44 : vector<1x16x32xf32> to vector<16x32xf32>
    %46 = arith.subf %43, %45 : vector<16x32xf32>
    %47 = math.absf %46 : vector<16x32xf32>
    %cst_22 = arith.constant dense<0.000000e+00> : vector<16xf32>
    %48 = vector.multi_reduction <add>, %47, %cst_22 [1] : vector<16x32xf32> to vector<16xf32>
    %49 = vector.shape_cast %48 : vector<16xf32> to vector<16x1xf32>
    %cst_23 = arith.constant 0.000000e+00 : f32
    %50 = vector.broadcast %cst_23 : f32 to vector<16x1xf32>
    %51 = arith.subf %50, %49 : vector<16x1xf32>
    %52 = math.exp %51 : vector<16x1xf32>
    %53 = arith.addf %41, %52 : vector<16x1xf32>
    %c3_24 = arith.constant 3 : index
    %c0_25 = arith.constant 0 : index
    %c0_26 = arith.constant 0 : index
    %54 = vector.load %arg1[%c3_24, %c0_25, %c0_26] : memref<4x16x32xf32, #tpu.memory_space<vmem>>, vector<1x16x32xf32>
    %55 = vector.shape_cast %54 : vector<1x16x32xf32> to vector<16x32xf32>
    %56 = arith.subf %43, %55 : vector<16x32xf32>
    %57 = math.absf %56 : vector<16x32xf32>
    %cst_27 = arith.constant dense<0.000000e+00> : vector<16xf32>
    %58 = vector.multi_reduction <add>, %57, %cst_27 [1] : vector<16x32xf32> to vector<16xf32>
    %59 = vector.shape_cast %58 : vector<16xf32> to vector<16x1xf32>
    %cst_28 = arith.constant 0.000000e+00 : f32
    %60 = vector.broadcast %cst_28 : f32 to vector<16x1xf32>
    %61 = arith.subf %60, %59 : vector<16x1xf32>
    %62 = math.exp %61 : vector<16x1xf32>
    %63 = arith.addf %53, %62 : vector<16x1xf32>
    %c2_29 = arith.constant 2 : index
    %c0_30 = arith.constant 0 : index
    %c0_31 = arith.constant 0 : index
    %64 = vector.load %arg1[%c2_29, %c0_30, %c0_31] : memref<4x16x32xf32, #tpu.memory_space<vmem>>, vector<1x16x32xf32>
    %65 = vector.shape_cast %64 : vector<1x16x32xf32> to vector<16x32xf32>
    %c3_32 = arith.constant 3 : index
    %c0_33 = arith.constant 0 : index
    %c0_34 = arith.constant 0 : index
    %66 = vector.load %arg1[%c3_32, %c0_33, %c0_34] : memref<4x16x32xf32, #tpu.memory_space<vmem>>, vector<1x16x32xf32>
    %67 = vector.shape_cast %66 : vector<1x16x32xf32> to vector<16x32xf32>
    %68 = arith.subf %65, %67 : vector<16x32xf32>
    %69 = math.absf %68 : vector<16x32xf32>
    %cst_35 = arith.constant dense<0.000000e+00> : vector<16xf32>
    %70 = vector.multi_reduction <add>, %69, %cst_35 [1] : vector<16x32xf32> to vector<16xf32>
    %71 = vector.shape_cast %70 : vector<16xf32> to vector<16x1xf32>
    %cst_36 = arith.constant 0.000000e+00 : f32
    %72 = vector.broadcast %cst_36 : f32 to vector<16x1xf32>
    %73 = arith.subf %72, %71 : vector<16x1xf32>
    %74 = math.exp %73 : vector<16x1xf32>
    %75 = arith.addf %63, %74 : vector<16x1xf32>
    %cst_37 = arith.constant 0.000000e+00 : f32
    %76 = vector.broadcast %cst_37 : f32 to vector<16x1xf32>
    %77 = arith.select %8, %75, %76 : vector<16x1xi1>, vector<16x1xf32>
    %c0_38 = arith.constant 0 : index
    %c0_39 = arith.constant 0 : index
    %78 = vector.load %arg3[%c0_38, %c0_39] : memref<1x1xf32, #tpu.memory_space<vmem>>, vector<1x1xf32>
    %79 = vector.shape_cast %77 : vector<16x1xf32> to vector<1x16x1xf32>
    %cst_40 = arith.constant dense<0.000000e+00> : vector<1xf32>
    %80 = vector.multi_reduction <add>, %79, %cst_40 [1, 2] : vector<1x16x1xf32> to vector<1xf32>
    %81 = vector.shape_cast %80 : vector<1xf32> to vector<1x1x1xf32>
    %82 = vector.extract %81[0, 0, 0] : f32 from vector<1x1x1xf32>
    %83 = vector.broadcast %82 : f32 to vector<1x1xf32>
    %84 = arith.addf %78, %83 : vector<1x1xf32>
    %c0_41 = arith.constant 0 : index
    %c0_42 = arith.constant 0 : index
    %85 = vector.load %arg3[%c0_41, %c0_42] : memref<1x1xf32, #tpu.memory_space<vmem>>, vector<1x1xf32>
    tpu.vector_store %arg3[%c0_41, %c0_42], %84 {strides = array<i32>} : memref<1x1xf32, #tpu.memory_space<vmem>>, vector<1x1xf32>,
    %c0_i32_43 = arith.constant 0 : i32
    %86 = arith.cmpi eq, %arg0, %c0_i32_43 : i32
    %87 = arith.extui %86 : i1 to i32
    %c0_i32_44 = arith.constant 0 : i32
    %88 = arith.cmpi ne, %87, %c0_i32_44 : i32
    scf.if %88 {
      %c0_45 = arith.constant 0 : index
      %c0_46 = arith.constant 0 : index
      %89 = vector.load %arg3[%c0_45, %c0_46] : memref<1x1xf32, #tpu.memory_space<vmem>>, vector<1x1xf32>
      %cst_47 = arith.constant 0.010416667 : f32
      %90 = vector.broadcast %cst_47 : f32 to vector<1x1xf32>
      %91 = arith.mulf %89, %90 : vector<1x1xf32>
      %c0_48 = arith.constant 0 : index
      %c0_49 = arith.constant 0 : index
      %92 = vector.load %arg2[%c0_48, %c0_49] : memref<1x1xf32, #tpu.memory_space<vmem>>, vector<1x1xf32>
      tpu.vector_store %arg2[%c0_48, %c0_49], %91 {strides = array<i32>} : memref<1x1xf32, #tpu.memory_space<vmem>>, vector<1x1xf32>,
    } else {
    }
    return
  }
  func.func @transform_0(%arg0: i32) -> (i32, i32, i32) {
    %c0_i32 = arith.constant 0 : i32
    %c0_i32_0 = arith.constant 0 : i32
    %c0_i32_1 = arith.constant 0 : i32
    return %c0_i32, %arg0, %c0_i32_0 : i32, i32, i32
  }
  func.func @transform_1(%arg0: i32) -> (i32, i32) {
    %c0_i32 = arith.constant 0 : i32
    %c0_i32_0 = arith.constant 0 : i32
    %c0_i32_1 = arith.constant 0 : i32
    return %c0_i32, %c0_i32_0 : i32, i32
  }
}

</mosaic_0001>

<llo_original>
// kernel: tpu_custom_call.1
$region0: #{tpu_custom_call.1}
  #allocation0 [shape = 'u32[]', space=smem, size = 0x4, offset = 0x4, fixed_abs, tag = 'smem constant byte address 0x4 - core index']
  #allocation1 [shape = 'u32[72,128]{1,0:T(1,128)}', space=vmem, size = 0x9000, scoped, tag = 'internal scratch']
  #allocation2 [shape = 'f32[1,1]{1,0:T(1,128)}', space=vmem, size = 0x200, scoped, tag = 'scratch operand']
  %s0 = inlined_call_operand.hbm [shape: f32[4,16,32], index: 0, kind: input, shape index: {}]
  %s1 = inlined_call_operand.hbm [shape: f32[1,1], index: 1, kind: output, shape index: {}]
  %s2 = sld [smem:[#allocation0]]
  $region26: #{tpu_custom_call.1} parent=0
    _
  %s4 = ssub.s32 1, %s2
  %s5 = scalar_select 0, %s4, %s2
  $region1: #{tpu_custom_call.1} parent=0
    #allocation3 [shape = 'u8[32768]{0}', space=vmem, size = 0x8000, scoped, tag = 'input window, operand 0, single buffered']
    #allocation4 [shape = 's32[1]{0}', space=sflag, size = 0x4, scoped, tag = 'scoped memory for tpu_custom_call.1']
    #allocation5 [shape = 's32[1]{0}', space=sflag, size = 0x4, scoped, tag = 'scoped memory for tpu_custom_call.1']
    #allocation6 [shape = 'u8[512]{0}', space=vmem, size = 0x400, scoped, tag = 'output window, operand 0, single buffered']
    %6 = vsyncpa [#allocation4], 0
    %7 = vsyncpa [#allocation5], 0
    // Predicated region
    $region2: #{tpu_custom_call.1} parent=1 // pred_check
      _
    $region3: #{tpu_custom_call.1} parent=1 // pred_check_branch
      %9 = sbr.rel (0) target = $region5
    $region4: #{tpu_custom_call.1} parent=1 // pred_region
      %11 = vsyncadd [#allocation4], 0
      %s12 = sshll.u32 %s0, 4
      %s13 = int_to_ptr.hbm [resolvable:$true] %s12
      %s14 = sshll.u32 [#allocation3], 4
      %s15 = int_to_ptr.vmem [resolvable:$true] %s14
      %20 = dma.hbm_to_vmem [thread:$0]  %s13, 1024, %s15, [#allocation4], 128, 128, 8
    $region5: #{tpu_custom_call.1} parent=1 // pred_fallthru
      _
    // Predicated region
    $region6: #{tpu_custom_call.1} parent=1 // pred_check
      _
    $region7: #{tpu_custom_call.1} parent=1 // pred_check_branch
      %22 = sbr.rel (0) target = $region9
    $region8: #{tpu_custom_call.1} parent=1 // pred_region
      %24 = dma.done [#allocation4], 1024
    $region9: #{tpu_custom_call.1} parent=1 // pred_fallthru
      _
    %p25 = scmp.eq.s32.totalorder 0, 0
    // Predicated region
    $region10: #{tpu_custom_call.1} parent=1 // pred_check
      %p26 = pneg %p25
    $region11: #{tpu_custom_call.1} parent=1 // pred_check_branch
      %28 = sbr.rel (%p26) target = $region13
    $region12: #{tpu_custom_call.1} parent=1 // pred_region
      %vm29 = vcmask 0
      %30 = vst.msk [vmem:[#allocation2] sm:$0x1] %vm29, 0.0
    $region13: #{tpu_custom_call.1} parent=1 // pred_fallthru
      _
    %v31 = vlaneseq
    %v32 = vshrl.u32 %v31, 7
    %v33 = vadd.s32 %v32, 8
    %s34 = smul.u32 0, 16
    %v35 = vstv %s34
    %v36 = vadd.s32 %v32, %v35
    %v37 = vadd.s32 %v33, %v35
    %vm38 = vcmp.lt.s32.totalorder %v36, 16
    %vm39 = vcmp.lt.s32.totalorder %v37, 16
    %v40 = vld [vmem:[#allocation3] sm:$0xff]
    %v41 = vld [vmem:[#allocation3 + $0x8] sm:$0xff]
    %s42 = scalar_lea.vmem [#allocation3], 16
    %v43 = vld [vmem:[%s42] sm:$0xff]
    %v44 = vld [vmem:[%s42 + $0x8] sm:$0xff]
    %v45 = vsub.f32 %v40, %v43
    %v46 = vsub.f32 %v41, %v44
    %v47 = vand.u32 2147483647, %v45
    %v48 = vand.u32 2147483647, %v46
    %vm49 = vcmask 261120
    %v50 = vsel %vm49, %v47, 0.0
    %51 = vadd.xlane.f32.xlu0 %v50
    %v52 = vpop.xlane.xlu0 %51
    %v53 = vsel %vm49, %v48, 0.0
    %54 = vadd.xlane.f32.xlu0 %v53
    %v55 = vpop.xlane.xlu0 %54
    %v56 = vsub.f32 0.0, %v52
    %v57 = vsub.f32 0.0, %v55
    %v58 = vmul.f32 %v56, 1.442695
    %v59 = vpow.pop %v58
    %v60 = vmul.f32 %v57, 1.442695
    %v61 = vpow.pop %v60
    %v62 = vadd.f32 %v59, 0.0
    %v63 = vadd.f32 %v61, 0.0
    %s64 = scalar_lea.vmem [#allocation3], 32
    %v65 = vld [vmem:[%s64] sm:$0xff]
    %v66 = vld [vmem:[%s64 + $0x8] sm:$0xff]
    %v67 = vsub.f32 %v40, %v65
    %v68 = vsub.f32 %v41, %v66
    %v69 = vand.u32 2147483647, %v67
    %v70 = vand.u32 2147483647, %v68
    %v71 = vsel %vm49, %v69, 0.0
    %72 = vadd.xlane.f32.xlu0 %v71
    %v73 = vpop.xlane.xlu0 %72
    %v74 = vsel %vm49, %v70, 0.0
    %75 = vadd.xlane.f32.xlu0 %v74
    %v76 = vpop.xlane.xlu0 %75
    %v77 = vsub.f32 0.0, %v73
    %v78 = vsub.f32 0.0, %v76
    %v79 = vmul.f32 %v77, 1.442695
    %v80 = vpow.pop %v79
    %v81 = vmul.f32 %v78, 1.442695
    %v82 = vpow.pop %v81
    %v83 = vadd.f32 %v62, %v80
    %v84 = vadd.f32 %v63, %v82
    %s85 = scalar_lea.vmem [#allocation3], 48
    %v86 = vld [vmem:[%s85] sm:$0xff]
    %v87 = vld [vmem:[%s85 + $0x8] sm:$0xff]
    %v88 = vsub.f32 %v40, %v86
    %v89 = vsub.f32 %v41, %v87
    %v90 = vand.u32 2147483647, %v88
    %v91 = vand.u32 2147483647, %v89
    %v92 = vsel %vm49, %v90, 0.0
    %93 = vadd.xlane.f32.xlu0 %v92
    %v94 = vpop.xlane.xlu0 %93
    %v95 = vsel %vm49, %v91, 0.0
    %96 = vadd.xlane.f32.xlu0 %v95
    %v97 = vpop.xlane.xlu0 %96
    %v98 = vsub.f32 0.0, %v94
    %v99 = vsub.f32 0.0, %v97
    %v100 = vmul.f32 %v98, 1.442695
    %v101 = vpow.pop %v100
    %v102 = vmul.f32 %v99, 1.442695
    %v103 = vpow.pop %v102
    %v104 = vadd.f32 %v83, %v101
    %v105 = vadd.f32 %v84, %v103
    %v106 = vsub.f32 %v43, %v65
    %v107 = vsub.f32 %v44, %v66
    %v108 = vand.u32 2147483647, %v106
    %v109 = vand.u32 2147483647, %v107
    %v110 = vsel %vm49, %v108, 0.0
    %111 = vadd.xlane.f32.xlu0 %v110
    %v112 = vpop.xlane.xlu0 %111
    %v113 = vsel %vm49, %v109, 0.0
    %114 = vadd.xlane.f32.xlu0 %v113
    %v115 = vpop.xlane.xlu0 %114
    %v116 = vsub.f32 0.0, %v112
    %v117 = vsub.f32 0.0, %v115
    %v118 = vmul.f32 %v116, 1.442695
    %v119 = vpow.pop %v118
    %v120 = vmul.f32 %v117, 1.442695
    %v121 = vpow.pop %v120
    %v122 = vadd.f32 %v104, %v119
    %v123 = vadd.f32 %v105, %v121
    %v124 = vsub.f32 %v43, %v86
    %v125 = vsub.f32 %v44, %v87
    %v126 = vand.u32 2147483647, %v124
    %v127 = vand.u32 2147483647, %v125
    %v128 = vsel %vm49, %v126, 0.0
    %129 = vadd.xlane.f32.xlu0 %v128
    %v130 = vpop.xlane.xlu0 %129
    %v131 = vsel %vm49, %v127, 0.0
    %132 = vadd.xlane.f32.xlu0 %v131
    %v133 = vpop.xlane.xlu0 %132
    %v134 = vsub.f32 0.0, %v130
    %v135 = vsub.f32 0.0, %v133
    %v136 = vmul.f32 %v134, 1.442695
    %v137 = vpow.pop %v136
    %v138 = vmul.f32 %v135, 1.442695
    %v139 = vpow.pop %v138
    %v140 = vadd.f32 %v122, %v137
    %v141 = vadd.f32 %v123, %v139
    %v142 = vsub.f32 %v65, %v86
    %v143 = vsub.f32 %v66, %v87
    %v144 = vand.u32 2147483647, %v142
    %v145 = vand.u32 2147483647, %v143
    %v146 = vsel %vm49, %v144, 0.0
    %147 = vadd.xlane.f32.xlu0 %v146
    %v148 = vpop.xlane.xlu0 %147
    %v149 = vsel %vm49, %v145, 0.0
    %150 = vadd.xlane.f32.xlu0 %v149
    %v151 = vpop.xlane.xlu0 %150
    %v152 = vsub.f32 0.0, %v148
    %v153 = vsub.f32 0.0, %v151
    %v154 = vmul.f32 %v152, 1.442695
    %v155 = vpow.pop %v154
    %v156 = vmul.f32 %v153, 1.442695
    %v157 = vpow.pop %v156
    %v158 = vadd.f32 %v140, %v155
    %v159 = vadd.f32 %v141, %v157
    %v160 = vsel %vm38, %v158, 0.0
    %v161 = vsel %vm39, %v159, 0.0
    %v162 = vld [vmem:[#allocation2] sm:$0x1]
    %vm163 = vcmask 7168
    %v164 = vsel %vm163, %v160, 0.0
    %v165 = vsel %vm163, %v161, 0.0
    %v166 = vadd.f32 %v164, %v165
    %167 = vadd.xlane.f32.xlu0 %v166
    %v168 = vpop.xlane.xlu0 %167
    %v169 = vrot.slane %v168, 4
    %v170 = vadd.f32 %v168, %v169
    %v171 = vrot.slane %v170, 2
    %v172 = vadd.f32 %v170, %v171
    %v173 = vrot.slane %v172, 1
    %v174 = vadd.f32 %v172, %v173
    %s175 = vtos %v174
    %v176 = vstv %s175
    %v177 = vadd.f32 %v162, %v176
    %vm178 = vcmask 0
    %179 = vst.msk [vmem:[#allocation2] sm:$0x1] %vm178, %v177
    // Predicated region
    $region14: #{tpu_custom_call.1} parent=1 // pred_check
      %p180 = pneg %p25
    $region15: #{tpu_custom_call.1} parent=1 // pred_check_branch
      %182 = sbr.rel (%p180) target = $region17
    $region16: #{tpu_custom_call.1} parent=1 // pred_region
      %v183 = vld [vmem:[#allocation2] sm:$0x1]
      %v184 = vmul.f32 %v183, 0.010416667
      %185 = vst.msk [vmem:[#allocation6] sm:$0x1] %vm178, %v184
    $region17: #{tpu_custom_call.1} parent=1 // pred_fallthru
      _
    // Predicated region
    $region18: #{tpu_custom_call.1} parent=1 // pred_check
      _
    $region19: #{tpu_custom_call.1} parent=1 // pred_check_branch
      %187 = sbr.rel (0) target = $region21
    $region20: #{tpu_custom_call.1} parent=1 // pred_region
      %189 = vsyncadd [#allocation5], 0
      %s191 = sshll.u32 [#allocation6], 4
      %s192 = int_to_ptr.vmem [resolvable:$true] %s191
      %s193 = sshll.u32 %s1, 4
      %s194 = int_to_ptr.hbm [resolvable:$true] %s193
      %196 = dma.vmem_to_hbm [thread:$0]  %s192, 16, %s194, [#allocation5]
    $region21: #{tpu_custom_call.1} parent=1 // pred_fallthru
      _
    // Predicated region
    $region22: #{tpu_custom_call.1} parent=1 // pred_check
      _
    $region23: #{tpu_custom_call.1} parent=1 // pred_check_branch
      %198 = sbr.rel (0) target = $region25
    $region24: #{tpu_custom_call.1} parent=1 // pred_region
      %200 = dma.done [#allocation5], 16
    $region25: #{tpu_custom_call.1} parent=1 // pred_fallthru
      _
    %201 = vsyncpa [#allocation4], 1
    %202 = vsyncpa [#allocation5], 1

</llo_original>
